<compile_context>
chip_gen: v7x
topology: tpu7x:2x2x1
jax: 0.10.0
libtpu: 0.0.40
codegen_flags: <defaults>
</compile_context>

<pallas_src>
import functools
import numpy as np
import jax
import jax.numpy as jnp
from jax.experimental import pallas as pl
from jax.experimental.pallas import tpu as pltpu


# Packed input column layout (f32):
#   0: label, 1: label-noise uniform p, 2: random replacement label, 3: valid flag,
#   4:6 box (cx, cy), 6:8 box (w, h), 8:10 box rand (for cx,cy), 10:12 box rand (for w,h),
#   12:128 zero padding (lane-dense single DMA).
_IN_W = 128


def _dn_query_kernel(packed_ref, embed_ref, out_ref, *,
                     num_classes, label_embed_dim, with_indicator,
                     label_noise_prob, box_noise_scale, eps, out_w):
    x = packed_ref[...]                       # (TQ, 128) f32
    tq = x.shape[0]
    emb_dim = embed_ref.shape[1]

    label_f = x[:, 0:1]
    p       = x[:, 1:2]
    rand_f  = x[:, 2:3]
    valid   = x[:, 3:4]
    xy      = x[:, 4:6]
    wh      = x[:, 6:8]
    r_xy    = x[:, 8:10]
    r_wh    = x[:, 10:12]

    # ---- label noise (static branch on the python float) ----
    if label_noise_prob > 0:
        noised_label = jnp.where(p < label_noise_prob, rand_f, label_f)
    else:
        noised_label = label_f

    # ---- exact embedding gather: VPU select over classes (bit-exact vs nn.Embedding) ----
    lbl_b = jnp.broadcast_to(noised_label, (tq, emb_dim))      # hoisted broadcast
    emb = jnp.zeros((tq, emb_dim), jnp.float32)
    for c in range(num_classes):                               # small, fully unrolled
        emb = jnp.where(lbl_b == float(c), embed_ref[c:c + 1, :], emb)

    # ---- box noise (diff computed in-kernel from w,h) + clamp + inverse_sigmoid ----
    if box_noise_scale > 0:
        nxy = jnp.clip(xy + (r_xy * 2.0 - 1.0) * (wh * 0.5) * box_noise_scale, 0.0, 1.0)
        nwh = jnp.clip(wh + (r_wh * 2.0 - 1.0) * wh * box_noise_scale, 0.0, 1.0)
    else:
        nxy, nwh = xy, wh

    def inv_sigmoid(v):
        v = jnp.clip(v, 0.0, 1.0)
        return jnp.log(jnp.maximum(v, eps) / jnp.maximum(1.0 - v, eps))

    # ---- assemble full lane-dense slab in vregs -> ONE unmasked full-width store ----
    parts = [emb * valid]                                      # invalid slots -> 0
    if with_indicator:
        parts.append(valid)                                    # indicator = 1 only on valid rows
    parts.append(inv_sigmoid(nxy) * valid)
    parts.append(inv_sigmoid(nwh) * valid)
    pad_w = out_w - (label_embed_dim + 4)
    if pad_w > 0:
        parts.append(jnp.zeros((tq, pad_w), jnp.float32))
    out_ref[...] = jnp.concatenate(parts, axis=1)


def _static_attn_mask(max_gt, groups, num_queries):
    # Mask depends only on static sizes -> host-side compile-time constant
    # (same semantics as GenerateDNQueries.generate_query_masks; True = attention blocked).
    nq = max_gt * groups
    tgt = nq + num_queries
    mask = np.zeros((tgt, tgt), np.bool_)
    mask[nq:, :nq] = True
    for i in range(groups):
        mask[max_gt * i:max_gt * (i + 1), max_gt * (i + 1):nq] = True
        mask[max_gt * i:max_gt * (i + 1), :max_gt * i] = True
    return jnp.asarray(mask)


def generate_dn_queries(gt_labels_list, gt_boxes_list, embed_weight, key,
                        num_queries=8, num_classes=16, label_embed_dim=32,
                        denoising_groups=3, label_noise_prob=0.2,
                        box_noise_scale=0.4, with_indicator=False):
    assert len(gt_labels_list) == len(gt_boxes_list)
    B = len(gt_labels_list)
    G = denoising_groups
    gt_nums = [int(x.shape[0]) for x in gt_labels_list]
    M = max(gt_nums)                                  # max_gt_num_per_image

    emb_dim = label_embed_dim - 1 if with_indicator else label_embed_dim
    assert embed_weight.shape == (num_classes, emb_dim)

    # ---- pad each image to M GTs (static shapes), then tile over groups: order (G, B, M) ----
    labels_bm = jnp.stack([
        jnp.concatenate([l.astype(jnp.int32), jnp.zeros((M - n,), jnp.int32)]) if M > n
        else l.astype(jnp.int32)
        for l, n in zip(gt_labels_list, gt_nums)])                    # (B, M)
    boxes_bm = jnp.stack([
        jnp.concatenate([b.astype(jnp.float32), jnp.zeros((M - n, 4), jnp.float32)], 0) if M > n
        else b.astype(jnp.float32)
        for b, n in zip(gt_boxes_list, gt_nums)])                     # (B, M, 4)

    Q = G * B * M
    TQ = min(512, ((Q + 7) // 8) * 8)                                 # sublane-aligned row tile
    Qp = ((Q + TQ - 1) // TQ) * TQ                                    # padded total rows
    n_tiles = Qp // TQ

    labels_q = jnp.tile(labels_bm[None], (G, 1, 1)).reshape(Q, 1).astype(jnp.float32)
    boxes_q = jnp.tile(boxes_bm[None], (G, 1, 1, 1)).reshape(Q, 4)

    valid_np = np.zeros((B, M), np.float32)
    for b, n in enumerate(gt_nums):
        valid_np[b, :n] = 1.0
    valid_q = np.tile(valid_np[None], (G, 1, 1)).reshape(Q, 1)
    valid_qp = np.concatenate([valid_q, np.zeros((Qp - Q, 1), np.float32)], 0) if Qp > Q else valid_q

    # ---- deterministic random draws (replace torch.rand / torch.randint) ----
    k1, k2, k3 = jax.random.split(key, 3)
    label_p = jax.random.uniform(k1, (Qp, 1), jnp.float32)
    rand_labels = jax.random.randint(k2, (Qp, 1), 0, num_classes).astype(jnp.float32)
    box_rand = jax.random.uniform(k3, (Qp, 4), jnp.float32)

    def pad_rows(a):
        if Qp == Q:
            return a
        return jnp.concatenate([a, jnp.zeros((Qp - Q,) + a.shape[1:], a.dtype)], 0)

    packed = jnp.concatenate([
        pad_rows(labels_q), label_p, rand_labels, jnp.asarray(valid_qp),
        pad_rows(boxes_q), box_rand,
        jnp.zeros((Qp, _IN_W - 12), jnp.float32),
    ], axis=1)                                                        # (Qp, 128)

    OUT_W = ((label_embed_dim + 4 + 127) // 128) * 128                # lane-dense output slab

    kernel = functools.partial(
        _dn_query_kernel,
        num_classes=num_classes, label_embed_dim=label_embed_dim,
        with_indicator=with_indicator,
        label_noise_prob=float(label_noise_prob),
        box_noise_scale=float(box_noise_scale), eps=1e-3, out_w=OUT_W)

    slab = pl.pallas_call(
        kernel,
        grid=(n_tiles,),
        in_specs=[
            pl.BlockSpec((TQ, _IN_W), lambda i: (i, 0)),
            pl.BlockSpec((num_classes, emb_dim), lambda i: (0, 0)),
        ],
        out_specs=pl.BlockSpec((TQ, OUT_W), lambda i: (i, 0)),
        out_shape=jax.ShapeDtypeStruct((Qp, OUT_W), jnp.float32),
        compiler_params=pltpu.CompilerParams(
            dimension_semantics=("parallel",)),
    )(packed, embed_weight.astype(jnp.float32))

    # ---- padded per-batch queries via reshape/transpose (no XLA scatter) ----
    noised_query_nums = M * G
    slab = slab[:Q].reshape(G, B, M, OUT_W).transpose(1, 0, 2, 3).reshape(B, noised_query_nums, OUT_W)
    noised_label_queries = slab[:, :, :label_embed_dim]
    noised_box_queries = slab[:, :, label_embed_dim:label_embed_dim + 4]

    attn_mask = _static_attn_mask(M, G, num_queries)                  # bool, True = blocked

    return noised_label_queries, noised_box_queries, attn_mask, G, M


if __name__ == "__main__":
    # Small, deterministic config consistent with the module:
    num_queries = 8
    num_classes = 16
    label_embed_dim = 32
    denoising_groups = 3
    with_indicator = False

    key = jax.random.PRNGKey(0)
    k_lbl1, k_lbl2, k_box1, k_box2, k_emb, k_noise = jax.random.split(key, 6)

    # batch of 2 images: 3 GTs and 2 GTs
    gt_labels_list = [
        jax.random.randint(k_lbl1, (3,), 0, num_classes, jnp.int32),
        jax.random.randint(k_lbl2, (2,), 0, num_classes, jnp.int32),
    ]
    gt_boxes_list = [
        jax.random.uniform(k_box1, (3, 4), jnp.float32, 0.1, 0.9),
        jax.random.uniform(k_box2, (2, 4), jnp.float32, 0.1, 0.9),
    ]

    emb_dim = label_embed_dim - 1 if with_indicator else label_embed_dim
    embed_weight = jax.random.normal(k_emb, (num_classes, emb_dim), jnp.float32)

    outs = generate_dn_queries(
        gt_labels_list, gt_boxes_list, embed_weight, k_noise,
        num_queries=num_queries, num_classes=num_classes,
        label_embed_dim=label_embed_dim, denoising_groups=denoising_groups,
        label_noise_prob=0.2, box_noise_scale=0.4, with_indicator=with_indicator)

    noised_label_queries, noised_box_queries, attn_mask, groups, max_gt = outs
    jax.block_until_ready((noised_label_queries, noised_box_queries, attn_mask))

    assert noised_label_queries.shape == (2, max_gt * groups, label_embed_dim)
    assert noised_box_queries.shape == (2, max_gt * groups, 4)
    assert attn_mask.shape == (max_gt * groups + num_queries,) * 2
    assert attn_mask.dtype == jnp.bool_
    assert bool(jnp.all(jnp.isfinite(noised_label_queries)))
    assert bool(jnp.all(jnp.isfinite(noised_box_queries)))
    # image 1 has only 2 GTs -> its 3rd slot in every group must be zero-padded
    for g in range(groups):
        assert float(jnp.abs(noised_label_queries[1, g * max_gt + 2]).max()) == 0.0
        assert float(jnp.abs(noised_box_queries[1, g * max_gt + 2]).max()) == 0.0
    print("KERNEL_OK")
</pallas_src>

<mosaic_0001>
module attributes {stable_mosaic.version = 11 : i64} {
  func.func @_dn_query_kernel(%arg0: i32, %arg1: memref<24x128xf32, #tpu.memory_space<vmem>>, %arg2: memref<16x32xf32, #tpu.memory_space<vmem>>, %arg3: memref<24x128xf32, #tpu.memory_space<vmem>>) attributes {dimension_semantics = [#tpu.dimension_semantics<parallel>], iteration_bounds = array<i64: 1>, scalar_prefetch = 0 : i64, scratch_operands = 0 : i64, tpu.core_type = #tpu.core_type<tc>, window_params = [{transform_indices = @transform_0, window_bounds = array<i64: 24, 128>}, {pipeline_mode = #tpu.pipeline_mode<synchronous>, transform_indices = @transform_1, window_bounds = array<i64: 16, 32>}, {transform_indices = @transform_2, window_bounds = array<i64: 24, 128>}]} {
    %c0 = arith.constant 0 : index
    %c0_0 = arith.constant 0 : index
    %0 = vector.load %arg1[%c0, %c0_0] : memref<24x128xf32, #tpu.memory_space<vmem>>, vector<24x128xf32>
    %1 = vector.extract_strided_slice %0 {offsets = [0, 0], sizes = [24, 1], strides = [1, 1]} : vector<24x128xf32> to vector<24x1xf32>
    %2 = vector.extract_strided_slice %0 {offsets = [0, 1], sizes = [24, 1], strides = [1, 1]} : vector<24x128xf32> to vector<24x1xf32>
    %3 = vector.extract_strided_slice %0 {offsets = [0, 2], sizes = [24, 1], strides = [1, 1]} : vector<24x128xf32> to vector<24x1xf32>
    %4 = vector.extract_strided_slice %0 {offsets = [0, 3], sizes = [24, 1], strides = [1, 1]} : vector<24x128xf32> to vector<24x1xf32>
    %5 = vector.extract_strided_slice %0 {offsets = [0, 4], sizes = [24, 2], strides = [1, 1]} : vector<24x128xf32> to vector<24x2xf32>
    %6 = vector.extract_strided_slice %0 {offsets = [0, 6], sizes = [24, 2], strides = [1, 1]} : vector<24x128xf32> to vector<24x2xf32>
    %7 = vector.extract_strided_slice %0 {offsets = [0, 8], sizes = [24, 2], strides = [1, 1]} : vector<24x128xf32> to vector<24x2xf32>
    %8 = vector.extract_strided_slice %0 {offsets = [0, 10], sizes = [24, 2], strides = [1, 1]} : vector<24x128xf32> to vector<24x2xf32>
    %cst = arith.constant 2.000000e-01 : f32
    %9 = vector.broadcast %cst : f32 to vector<24x1xf32>
    %10 = arith.cmpf olt, %2, %9 : vector<24x1xf32>
    %11 = arith.select %10, %3, %1 : vector<24x1xi1>, vector<24x1xf32>
    %12 = vector.shape_cast %11 : vector<24x1xf32> to vector<24x1xf32>
    %13 = vector.broadcast %12 : vector<24x1xf32> to vector<24x32xf32>
    %cst_1 = arith.constant 0.000000e+00 : f32
    %14 = vector.broadcast %cst_1 : f32 to vector<24x32xf32>
    %cst_2 = arith.constant 0.000000e+00 : f32
    %15 = vector.broadcast %cst_2 : f32 to vector<24x32xf32>
    %16 = arith.cmpf oeq, %13, %15 : vector<24x32xf32>
    %c0_3 = arith.constant 0 : index
    %c0_4 = arith.constant 0 : index
    %17 = vector.load %arg2[%c0_3, %c0_4] : memref<16x32xf32, #tpu.memory_space<vmem>>, vector<1x32xf32>
    %18 = vector.shape_cast %17 : vector<1x32xf32> to vector<1x32xf32>
    %19 = vector.broadcast %18 : vector<1x32xf32> to vector<24x32xf32>
    %20 = arith.select %16, %19, %14 : vector<24x32xi1>, vector<24x32xf32>
    %cst_5 = arith.constant 1.000000e+00 : f32
    %21 = vector.broadcast %cst_5 : f32 to vector<24x32xf32>
    %22 = arith.cmpf oeq, %13, %21 : vector<24x32xf32>
    %c1 = arith.constant 1 : index
    %c0_6 = arith.constant 0 : index
    %23 = vector.load %arg2[%c1, %c0_6] : memref<16x32xf32, #tpu.memory_space<vmem>>, vector<1x32xf32>
    %24 = vector.shape_cast %23 : vector<1x32xf32> to vector<1x32xf32>
    %25 = vector.broadcast %24 : vector<1x32xf32> to vector<24x32xf32>
    %26 = arith.select %22, %25, %20 : vector<24x32xi1>, vector<24x32xf32>
    %cst_7 = arith.constant 2.000000e+00 : f32
    %27 = vector.broadcast %cst_7 : f32 to vector<24x32xf32>
    %28 = arith.cmpf oeq, %13, %27 : vector<24x32xf32>
    %c2 = arith.constant 2 : index
    %c0_8 = arith.constant 0 : index
    %29 = vector.load %arg2[%c2, %c0_8] : memref<16x32xf32, #tpu.memory_space<vmem>>, vector<1x32xf32>
    %30 = vector.shape_cast %29 : vector<1x32xf32> to vector<1x32xf32>
    %31 = vector.broadcast %30 : vector<1x32xf32> to vector<24x32xf32>
    %32 = arith.select %28, %31, %26 : vector<24x32xi1>, vector<24x32xf32>
    %cst_9 = arith.constant 3.000000e+00 : f32
    %33 = vector.broadcast %cst_9 : f32 to vector<24x32xf32>
    %34 = arith.cmpf oeq, %13, %33 : vector<24x32xf32>
    %c3 = arith.constant 3 : index
    %c0_10 = arith.constant 0 : index
    %35 = vector.load %arg2[%c3, %c0_10] : memref<16x32xf32, #tpu.memory_space<vmem>>, vector<1x32xf32>
    %36 = vector.shape_cast %35 : vector<1x32xf32> to vector<1x32xf32>
    %37 = vector.broadcast %36 : vector<1x32xf32> to vector<24x32xf32>
    %38 = arith.select %34, %37, %32 : vector<24x32xi1>, vector<24x32xf32>
    %cst_11 = arith.constant 4.000000e+00 : f32
    %39 = vector.broadcast %cst_11 : f32 to vector<24x32xf32>
    %40 = arith.cmpf oeq, %13, %39 : vector<24x32xf32>
    %c4 = arith.constant 4 : index
    %c0_12 = arith.constant 0 : index
    %41 = vector.load %arg2[%c4, %c0_12] : memref<16x32xf32, #tpu.memory_space<vmem>>, vector<1x32xf32>
    %42 = vector.shape_cast %41 : vector<1x32xf32> to vector<1x32xf32>
    %43 = vector.broadcast %42 : vector<1x32xf32> to vector<24x32xf32>
    %44 = arith.select %40, %43, %38 : vector<24x32xi1>, vector<24x32xf32>
    %cst_13 = arith.constant 5.000000e+00 : f32
    %45 = vector.broadcast %cst_13 : f32 to vector<24x32xf32>
    %46 = arith.cmpf oeq, %13, %45 : vector<24x32xf32>
    %c5 = arith.constant 5 : index
    %c0_14 = arith.constant 0 : index
    %47 = vector.load %arg2[%c5, %c0_14] : memref<16x32xf32, #tpu.memory_space<vmem>>, vector<1x32xf32>
    %48 = vector.shape_cast %47 : vector<1x32xf32> to vector<1x32xf32>
    %49 = vector.broadcast %48 : vector<1x32xf32> to vector<24x32xf32>
    %50 = arith.select %46, %49, %44 : vector<24x32xi1>, vector<24x32xf32>
    %cst_15 = arith.constant 6.000000e+00 : f32
    %51 = vector.broadcast %cst_15 : f32 to vector<24x32xf32>
    %52 = arith.cmpf oeq, %13, %51 : vector<24x32xf32>
    %c6 = arith.constant 6 : index
    %c0_16 = arith.constant 0 : index
    %53 = vector.load %arg2[%c6, %c0_16] : memref<16x32xf32, #tpu.memory_space<vmem>>, vector<1x32xf32>
    %54 = vector.shape_cast %53 : vector<1x32xf32> to vector<1x32xf32>
    %55 = vector.broadcast %54 : vector<1x32xf32> to vector<24x32xf32>
    %56 = arith.select %52, %55, %50 : vector<24x32xi1>, vector<24x32xf32>
    %cst_17 = arith.constant 7.000000e+00 : f32
    %57 = vector.broadcast %cst_17 : f32 to vector<24x32xf32>
    %58 = arith.cmpf oeq, %13, %57 : vector<24x32xf32>
    %c7 = arith.constant 7 : index
    %c0_18 = arith.constant 0 : index
    %59 = vector.load %arg2[%c7, %c0_18] : memref<16x32xf32, #tpu.memory_space<vmem>>, vector<1x32xf32>
    %60 = vector.shape_cast %59 : vector<1x32xf32> to vector<1x32xf32>
    %61 = vector.broadcast %60 : vector<1x32xf32> to vector<24x32xf32>
    %62 = arith.select %58, %61, %56 : vector<24x32xi1>, vector<24x32xf32>
    %cst_19 = arith.constant 8.000000e+00 : f32
    %63 = vector.broadcast %cst_19 : f32 to vector<24x32xf32>
    %64 = arith.cmpf oeq, %13, %63 : vector<24x32xf32>
    %c8 = arith.constant 8 : index
    %c0_20 = arith.constant 0 : index
    %65 = vector.load %arg2[%c8, %c0_20] : memref<16x32xf32, #tpu.memory_space<vmem>>, vector<1x32xf32>
    %66 = vector.shape_cast %65 : vector<1x32xf32> to vector<1x32xf32>
    %67 = vector.broadcast %66 : vector<1x32xf32> to vector<24x32xf32>
    %68 = arith.select %64, %67, %62 : vector<24x32xi1>, vector<24x32xf32>
    %cst_21 = arith.constant 9.000000e+00 : f32
    %69 = vector.broadcast %cst_21 : f32 to vector<24x32xf32>
    %70 = arith.cmpf oeq, %13, %69 : vector<24x32xf32>
    %c9 = arith.constant 9 : index
    %c0_22 = arith.constant 0 : index
    %71 = vector.load %arg2[%c9, %c0_22] : memref<16x32xf32, #tpu.memory_space<vmem>>, vector<1x32xf32>
    %72 = vector.shape_cast %71 : vector<1x32xf32> to vector<1x32xf32>
    %73 = vector.broadcast %72 : vector<1x32xf32> to vector<24x32xf32>
    %74 = arith.select %70, %73, %68 : vector<24x32xi1>, vector<24x32xf32>
    %cst_23 = arith.constant 1.000000e+01 : f32
    %75 = vector.broadcast %cst_23 : f32 to vector<24x32xf32>
    %76 = arith.cmpf oeq, %13, %75 : vector<24x32xf32>
    %c10 = arith.constant 10 : index
    %c0_24 = arith.constant 0 : index
    %77 = vector.load %arg2[%c10, %c0_24] : memref<16x32xf32, #tpu.memory_space<vmem>>, vector<1x32xf32>
    %78 = vector.shape_cast %77 : vector<1x32xf32> to vector<1x32xf32>
    %79 = vector.broadcast %78 : vector<1x32xf32> to vector<24x32xf32>
    %80 = arith.select %76, %79, %74 : vector<24x32xi1>, vector<24x32xf32>
    %cst_25 = arith.constant 1.100000e+01 : f32
    %81 = vector.broadcast %cst_25 : f32 to vector<24x32xf32>
    %82 = arith.cmpf oeq, %13, %81 : vector<24x32xf32>
    %c11 = arith.constant 11 : index
    %c0_26 = arith.constant 0 : index
    %83 = vector.load %arg2[%c11, %c0_26] : memref<16x32xf32, #tpu.memory_space<vmem>>, vector<1x32xf32>
    %84 = vector.shape_cast %83 : vector<1x32xf32> to vector<1x32xf32>
    %85 = vector.broadcast %84 : vector<1x32xf32> to vector<24x32xf32>
    %86 = arith.select %82, %85, %80 : vector<24x32xi1>, vector<24x32xf32>
    %cst_27 = arith.constant 1.200000e+01 : f32
    %87 = vector.broadcast %cst_27 : f32 to vector<24x32xf32>
    %88 = arith.cmpf oeq, %13, %87 : vector<24x32xf32>
    %c12 = arith.constant 12 : index
    %c0_28 = arith.constant 0 : index
    %89 = vector.load %arg2[%c12, %c0_28] : memref<16x32xf32, #tpu.memory_space<vmem>>, vector<1x32xf32>
    %90 = vector.shape_cast %89 : vector<1x32xf32> to vector<1x32xf32>
    %91 = vector.broadcast %90 : vector<1x32xf32> to vector<24x32xf32>
    %92 = arith.select %88, %91, %86 : vector<24x32xi1>, vector<24x32xf32>
    %cst_29 = arith.constant 1.300000e+01 : f32
    %93 = vector.broadcast %cst_29 : f32 to vector<24x32xf32>
    %94 = arith.cmpf oeq, %13, %93 : vector<24x32xf32>
    %c13 = arith.constant 13 : index
    %c0_30 = arith.constant 0 : index
    %95 = vector.load %arg2[%c13, %c0_30] : memref<16x32xf32, #tpu.memory_space<vmem>>, vector<1x32xf32>
    %96 = vector.shape_cast %95 : vector<1x32xf32> to vector<1x32xf32>
    %97 = vector.broadcast %96 : vector<1x32xf32> to vector<24x32xf32>
    %98 = arith.select %94, %97, %92 : vector<24x32xi1>, vector<24x32xf32>
    %cst_31 = arith.constant 1.400000e+01 : f32
    %99 = vector.broadcast %cst_31 : f32 to vector<24x32xf32>
    %100 = arith.cmpf oeq, %13, %99 : vector<24x32xf32>
    %c14 = arith.constant 14 : index
    %c0_32 = arith.constant 0 : index
    %101 = vector.load %arg2[%c14, %c0_32] : memref<16x32xf32, #tpu.memory_space<vmem>>, vector<1x32xf32>
    %102 = vector.shape_cast %101 : vector<1x32xf32> to vector<1x32xf32>
    %103 = vector.broadcast %102 : vector<1x32xf32> to vector<24x32xf32>
    %104 = arith.select %100, %103, %98 : vector<24x32xi1>, vector<24x32xf32>
    %cst_33 = arith.constant 1.500000e+01 : f32
    %105 = vector.broadcast %cst_33 : f32 to vector<24x32xf32>
    %106 = arith.cmpf oeq, %13, %105 : vector<24x32xf32>
    %c15 = arith.constant 15 : index
    %c0_34 = arith.constant 0 : index
    %107 = vector.load %arg2[%c15, %c0_34] : memref<16x32xf32, #tpu.memory_space<vmem>>, vector<1x32xf32>
    %108 = vector.shape_cast %107 : vector<1x32xf32> to vector<1x32xf32>
    %109 = vector.broadcast %108 : vector<1x32xf32> to vector<24x32xf32>
    %110 = arith.select %106, %109, %104 : vector<24x32xi1>, vector<24x32xf32>
    %cst_35 = arith.constant 2.000000e+00 : f32
    %111 = vector.broadcast %cst_35 : f32 to vector<24x2xf32>
    %112 = arith.mulf %7, %111 : vector<24x2xf32>
    %cst_36 = arith.constant 1.000000e+00 : f32
    %113 = vector.broadcast %cst_36 : f32 to vector<24x2xf32>
    %114 = arith.subf %112, %113 : vector<24x2xf32>
    %cst_37 = arith.constant 5.000000e-01 : f32
    %115 = vector.broadcast %cst_37 : f32 to vector<24x2xf32>
    %116 = arith.mulf %6, %115 : vector<24x2xf32>
    %117 = arith.mulf %114, %116 : vector<24x2xf32>
    %cst_38 = arith.constant 4.000000e-01 : f32
    %118 = vector.broadcast %cst_38 : f32 to vector<24x2xf32>
    %119 = arith.mulf %117, %118 : vector<24x2xf32>
    %120 = arith.addf %5, %119 : vector<24x2xf32>
    %cst_39 = arith.constant 0.000000e+00 : f32
    %cst_40 = arith.constant 1.000000e+00 : f32
    %121 = vector.broadcast %cst_39 : f32 to vector<24x2xf32>
    %122 = arith.maximumf %121, %120 : vector<24x2xf32>
    %123 = vector.broadcast %cst_40 : f32 to vector<24x2xf32>
    %124 = arith.minimumf %123, %122 : vector<24x2xf32>
    %cst_41 = arith.constant 2.000000e+00 : f32
    %125 = vector.broadcast %cst_41 : f32 to vector<24x2xf32>
    %126 = arith.mulf %8, %125 : vector<24x2xf32>
    %cst_42 = arith.constant 1.000000e+00 : f32
    %127 = vector.broadcast %cst_42 : f32 to vector<24x2xf32>
    %128 = arith.subf %126, %127 : vector<24x2xf32>
    %129 = arith.mulf %128, %6 : vector<24x2xf32>
    %cst_43 = arith.constant 4.000000e-01 : f32
    %130 = vector.broadcast %cst_43 : f32 to vector<24x2xf32>
    %131 = arith.mulf %129, %130 : vector<24x2xf32>
    %132 = arith.addf %6, %131 : vector<24x2xf32>
    %cst_44 = arith.constant 0.000000e+00 : f32
    %cst_45 = arith.constant 1.000000e+00 : f32
    %133 = vector.broadcast %cst_44 : f32 to vector<24x2xf32>
    %134 = arith.maximumf %133, %132 : vector<24x2xf32>
    %135 = vector.broadcast %cst_45 : f32 to vector<24x2xf32>
    %136 = arith.minimumf %135, %134 : vector<24x2xf32>
    %137 = vector.broadcast %4 : vector<24x1xf32> to vector<24x32xf32>
    %138 = arith.mulf %110, %137 : vector<24x32xf32>
    %cst_46 = arith.constant 0.000000e+00 : f32
    %cst_47 = arith.constant 1.000000e+00 : f32
    %139 = vector.broadcast %cst_46 : f32 to vector<24x2xf32>
    %140 = arith.maximumf %139, %124 : vector<24x2xf32>
    %141 = vector.broadcast %cst_47 : f32 to vector<24x2xf32>
    %142 = arith.minimumf %141, %140 : vector<24x2xf32>
    %cst_48 = arith.constant 1.000000e-03 : f32
    %143 = vector.broadcast %cst_48 : f32 to vector<24x2xf32>
    %144 = arith.maximumf %142, %143 : vector<24x2xf32>
    %cst_49 = arith.constant 1.000000e+00 : f32
    %145 = vector.broadcast %cst_49 : f32 to vector<24x2xf32>
    %146 = arith.subf %145, %142 : vector<24x2xf32>
    %cst_50 = arith.constant 1.000000e-03 : f32
    %147 = vector.broadcast %cst_50 : f32 to vector<24x2xf32>
    %148 = arith.maximumf %146, %147 : vector<24x2xf32>
    %149 = arith.divf %144, %148 : vector<24x2xf32>
    %150 = math.log %149 : vector<24x2xf32>
    %151 = vector.broadcast %4 : vector<24x1xf32> to vector<24x2xf32>
    %152 = arith.mulf %150, %151 : vector<24x2xf32>
    %cst_51 = arith.constant 0.000000e+00 : f32
    %cst_52 = arith.constant 1.000000e+00 : f32
    %153 = vector.broadcast %cst_51 : f32 to vector<24x2xf32>
    %154 = arith.maximumf %153, %136 : vector<24x2xf32>
    %155 = vector.broadcast %cst_52 : f32 to vector<24x2xf32>
    %156 = arith.minimumf %155, %154 : vector<24x2xf32>
    %cst_53 = arith.constant 1.000000e-03 : f32
    %157 = vector.broadcast %cst_53 : f32 to vector<24x2xf32>
    %158 = arith.maximumf %156, %157 : vector<24x2xf32>
    %cst_54 = arith.constant 1.000000e+00 : f32
    %159 = vector.broadcast %cst_54 : f32 to vector<24x2xf32>
    %160 = arith.subf %159, %156 : vector<24x2xf32>
    %cst_55 = arith.constant 1.000000e-03 : f32
    %161 = vector.broadcast %cst_55 : f32 to vector<24x2xf32>
    %162 = arith.maximumf %160, %161 : vector<24x2xf32>
    %163 = arith.divf %158, %162 : vector<24x2xf32>
    %164 = math.log %163 : vector<24x2xf32>
    %165 = vector.broadcast %4 : vector<24x1xf32> to vector<24x2xf32>
    %166 = arith.mulf %164, %165 : vector<24x2xf32>
    %cst_56 = arith.constant 0.000000e+00 : f32
    %167 = vector.broadcast %cst_56 : f32 to vector<24x92xf32>
    %168 = tpu.concatenate %138, %152, %166, %167 in 1 : vector<24x32xf32>, vector<24x2xf32>, vector<24x2xf32>, vector<24x92xf32> -> vector<24x128xf32>
    %c0_57 = arith.constant 0 : index
    %c0_58 = arith.constant 0 : index
    %169 = vector.load %arg3[%c0_57, %c0_58] : memref<24x128xf32, #tpu.memory_space<vmem>>, vector<24x128xf32>
    tpu.vector_store %arg3[%c0_57, %c0_58], %168 {strides = array<i32>} : memref<24x128xf32, #tpu.memory_space<vmem>>, vector<24x128xf32>,
    return
  }
  func.func @transform_0(%arg0: i32) -> (i32, i32) {
    %c0_i32 = arith.constant 0 : i32
    %c0_i32_0 = arith.constant 0 : i32
    return %arg0, %c0_i32 : i32, i32
  }
  func.func @transform_1(%arg0: i32) -> (i32, i32) {
    %c0_i32 = arith.constant 0 : i32
    %c0_i32_0 = arith.constant 0 : i32
    %c0_i32_1 = arith.constant 0 : i32
    return %c0_i32, %c0_i32_0 : i32, i32
  }
  func.func @transform_2(%arg0: i32) -> (i32, i32) {
    %c0_i32 = arith.constant 0 : i32
    %c0_i32_0 = arith.constant 0 : i32
    return %arg0, %c0_i32 : i32, i32
  }
}

</mosaic_0001>

<llo_original>
// kernel: tpu_custom_call.1
$region0: #{tpu_custom_call.1}
  #allocation0 [shape = 'u32[]', space=smem, size = 0x4, offset = 0x4, fixed_abs, tag = 'smem constant byte address 0x4 - core index']
  #allocation1 [shape = 'u32[144,128]{1,0:T(1,128)}', space=vmem, size = 0x12000, scoped, tag = 'internal scratch']
  %s0 = inlined_call_operand.hbm [shape: f32[24,128], index: 0, kind: input, shape index: {}]
  %s1 = inlined_call_operand.hbm [shape: f32[16,32], index: 1, kind: input, shape index: {}]
  %s2 = inlined_call_operand.hbm [shape: f32[24,128], index: 2, kind: output, shape index: {}]
  %s3 = sld [smem:[#allocation0]]
  $region26: #{tpu_custom_call.1} parent=0
    _
  %s5 = ssub.s32 1, %s3
  %s6 = scalar_select 0, %s5, %s3
  $region1: #{tpu_custom_call.1} parent=0
    #allocation2 [shape = 'u8[12288]{0}', space=vmem, size = 0x3000, scoped, tag = 'input window, operand 0, single buffered']
    #allocation3 [shape = 's32[1]{0}', space=sflag, size = 0x4, scoped, tag = 'scoped memory for tpu_custom_call.1']
    #allocation4 [shape = 's32[1]{0}', space=sflag, size = 0x4, scoped, tag = 'scoped memory for tpu_custom_call.1']
    #allocation5 [shape = 'u8[8192]{0}', space=vmem, size = 0x2000, scoped, tag = 'input window, operand 1, single buffered']
    #allocation6 [shape = 's32[1]{0}', space=sflag, size = 0x4, scoped, tag = 'scoped memory for tpu_custom_call.1']
    #allocation7 [shape = 'u8[12288]{0}', space=vmem, size = 0x3000, scoped, tag = 'output window, operand 0, single buffered']
    %7 = vsyncpa [#allocation3], 0
    %8 = vsyncpa [#allocation6], 0
    %9 = vsyncpa [#allocation4], 0
    // Predicated region
    $region2: #{tpu_custom_call.1} parent=1 // pred_check
      _
    $region3: #{tpu_custom_call.1} parent=1 // pred_check_branch
      %11 = sbr.rel (0) target = $region5
    $region4: #{tpu_custom_call.1} parent=1 // pred_region
      %s13 = ssub.s32 384, 384
      %14 = vsyncadd [#allocation3], %s13
      %s15 = sshll.u32 [#allocation2], 4
      %s16 = int_to_ptr.vmem [resolvable:$true] %s15
      %21 = dma.hbm_to_vmem [thread:$0]  %s0, 384, %s16, [#allocation3], 128, 128, 8
    $region5: #{tpu_custom_call.1} parent=1 // pred_fallthru
      _
    // Predicated region
    $region6: #{tpu_custom_call.1} parent=1 // pred_check
      _
    $region7: #{tpu_custom_call.1} parent=1 // pred_check_branch
      %23 = sbr.rel (0) target = $region9
    $region8: #{tpu_custom_call.1} parent=1 // pred_region
      %s25 = ssub.s32 256, 256
      %26 = vsyncadd [#allocation6], %s25
      %s27 = sshll.u32 [#allocation5], 4
      %s28 = int_to_ptr.vmem [resolvable:$true] %s27
      %33 = dma.hbm_to_vmem [thread:$0]  %s1, 256, %s28, [#allocation6], 128, 128, 8
    $region9: #{tpu_custom_call.1} parent=1 // pred_fallthru
      _
    // Predicated region
    $region10: #{tpu_custom_call.1} parent=1 // pred_check
      _
    $region11: #{tpu_custom_call.1} parent=1 // pred_check_branch
      %35 = sbr.rel (0) target = $region13
    $region12: #{tpu_custom_call.1} parent=1 // pred_region
      %36 = dma.done [#allocation3], 384
    $region13: #{tpu_custom_call.1} parent=1 // pred_fallthru
      _
    // Predicated region
    $region14: #{tpu_custom_call.1} parent=1 // pred_check
      _
    $region15: #{tpu_custom_call.1} parent=1 // pred_check_branch
      %38 = sbr.rel (0) target = $region17
    $region16: #{tpu_custom_call.1} parent=1 // pred_region
      %39 = dma.done [#allocation6], 256
    $region17: #{tpu_custom_call.1} parent=1 // pred_fallthru
      _
    %v40 = vld [vmem:[#allocation2] sm:$0xff]
    %v41 = vld [vmem:[#allocation2 + $0x8] sm:$0xff]
    %v42 = vld [vmem:[#allocation2 + $0x10] sm:$0xff]
    %vm43 = vcmp.lt.f32.partialorder %v40, 0.2
    %vm44 = vcmp.lt.f32.partialorder %v41, 0.2
    %vm45 = vcmp.lt.f32.partialorder %v42, 0.2
    %49 = vrot.lane.b32.xlu0 %v40, 127
    %v50 = vpop.permute.xlu0 %49
    %51 = vrot.lane.b32.xlu0 %v41, 127
    %v52 = vpop.permute.xlu0 %51
    %53 = vrot.lane.b32.xlu0 %v42, 127
    %v54 = vpop.permute.xlu0 %53
    %58 = vrot.lane.b32.xlu0 %v40, 1
    %v59 = vpop.permute.xlu0 %58
    %60 = vrot.lane.b32.xlu0 %v41, 1
    %v61 = vpop.permute.xlu0 %60
    %62 = vrot.lane.b32.xlu0 %v42, 1
    %v63 = vpop.permute.xlu0 %62
    %v67 = vsel %vm43, %v50, %v59
    %v68 = vsel %vm44, %v52, %v61
    %v69 = vsel %vm45, %v54, %v63
    %71 = vset.pattern.permute.xlu0 1
    %72 = vperm.xlu0 %71, %v67
    %v73 = vpop.permute.xlu0 %72
    %76 = vset.pattern.permute.xlu0 1
    %77 = vperm.xlu0 %76, %v68
    %v78 = vpop.permute.xlu0 %77
    %81 = vset.pattern.permute.xlu0 1
    %82 = vperm.xlu0 %81, %v69
    %v83 = vpop.permute.xlu0 %82
    %vm85 = vcmp.eq.f32.partialorder %v73, 0.0
    %vm86 = vcmp.eq.f32.partialorder %v78, 0.0
    %vm87 = vcmp.eq.f32.partialorder %v83, 0.0
    %v88 = vld [vmem:[#allocation5] sm:$0x1]
    %v89 = vlaneseq
    %v90 = vshrl.u32 %v89, 7
    %v91 = vsub.s32 0, %v90
    %v92 = vrot.slane %v88, %v91
    %v93 = vsel %vm85, %v92, 0.0
    %v94 = vsel %vm86, %v92, 0.0
    %v95 = vsel %vm87, %v92, 0.0
    %vm96 = vcmp.eq.f32.partialorder %v73, 1.0
    %vm97 = vcmp.eq.f32.partialorder %v78, 1.0
    %vm98 = vcmp.eq.f32.partialorder %v83, 1.0
    %v99 = vld [vmem:[#allocation5 + $0x1] sm:$0x1]
    %v100 = vlaneseq
    %v101 = vshrl.u32 %v100, 7
    %v102 = vsub.s32 0, %v101
    %v103 = vrot.slane %v99, %v102
    %v104 = vsel %vm96, %v103, %v93
    %v105 = vsel %vm97, %v103, %v94
    %v106 = vsel %vm98, %v103, %v95
    %vm107 = vcmp.eq.f32.partialorder %v73, 2.0
    %vm108 = vcmp.eq.f32.partialorder %v78, 2.0
    %vm109 = vcmp.eq.f32.partialorder %v83, 2.0
    %v110 = vld [vmem:[#allocation5 + $0x2] sm:$0x1]
    %v111 = vlaneseq
    %v112 = vshrl.u32 %v111, 7
    %v113 = vsub.s32 0, %v112
    %v114 = vrot.slane %v110, %v113
    %v115 = vsel %vm107, %v114, %v104
    %v116 = vsel %vm108, %v114, %v105
    %v117 = vsel %vm109, %v114, %v106
    %vm118 = vcmp.eq.f32.partialorder %v73, 3.0
    %vm119 = vcmp.eq.f32.partialorder %v78, 3.0
    %vm120 = vcmp.eq.f32.partialorder %v83, 3.0
    %v121 = vld [vmem:[#allocation5 + $0x3] sm:$0x1]
    %v122 = vlaneseq
    %v123 = vshrl.u32 %v122, 7
    %v124 = vsub.s32 0, %v123
    %v125 = vrot.slane %v121, %v124
    %v126 = vsel %vm118, %v125, %v115
    %v127 = vsel %vm119, %v125, %v116
    %v128 = vsel %vm120, %v125, %v117
    %vm129 = vcmp.eq.f32.partialorder %v73, 4.0
    %vm130 = vcmp.eq.f32.partialorder %v78, 4.0
    %vm131 = vcmp.eq.f32.partialorder %v83, 4.0
    %v132 = vld [vmem:[#allocation5 + $0x4] sm:$0x1]
    %v133 = vlaneseq
    %v134 = vshrl.u32 %v133, 7
    %v135 = vsub.s32 0, %v134
    %v136 = vrot.slane %v132, %v135
    %v137 = vsel %vm129, %v136, %v126
    %v138 = vsel %vm130, %v136, %v127
    %v139 = vsel %vm131, %v136, %v128
    %vm140 = vcmp.eq.f32.partialorder %v73, 5.0
    %vm141 = vcmp.eq.f32.partialorder %v78, 5.0
    %vm142 = vcmp.eq.f32.partialorder %v83, 5.0
    %v143 = vld [vmem:[#allocation5 + $0x5] sm:$0x1]
    %v144 = vlaneseq
    %v145 = vshrl.u32 %v144, 7
    %v146 = vsub.s32 0, %v145
    %v147 = vrot.slane %v143, %v146
    %v148 = vsel %vm140, %v147, %v137
    %v149 = vsel %vm141, %v147, %v138
    %v150 = vsel %vm142, %v147, %v139
    %vm151 = vcmp.eq.f32.partialorder %v73, 6.0
    %vm152 = vcmp.eq.f32.partialorder %v78, 6.0
    %vm153 = vcmp.eq.f32.partialorder %v83, 6.0
    %v154 = vld [vmem:[#allocation5 + $0x6] sm:$0x1]
    %v155 = vlaneseq
    %v156 = vshrl.u32 %v155, 7
    %v157 = vsub.s32 0, %v156
    %v158 = vrot.slane %v154, %v157
    %v159 = vsel %vm151, %v158, %v148
    %v160 = vsel %vm152, %v158, %v149
    %v161 = vsel %vm153, %v158, %v150
    %vm162 = vcmp.eq.f32.partialorder %v73, 7.0
    %vm163 = vcmp.eq.f32.partialorder %v78, 7.0
    %vm164 = vcmp.eq.f32.partialorder %v83, 7.0
    %v165 = vld [vmem:[#allocation5 + $0x7] sm:$0x1]
    %v166 = vlaneseq
    %v167 = vshrl.u32 %v166, 7
    %v168 = vsub.s32 0, %v167
    %v169 = vrot.slane %v165, %v168
    %v170 = vsel %vm162, %v169, %v159
    %v171 = vsel %vm163, %v169, %v160
    %v172 = vsel %vm164, %v169, %v161
    %vm173 = vcmp.eq.f32.partialorder %v73, 8.0
    %vm174 = vcmp.eq.f32.partialorder %v78, 8.0
    %vm175 = vcmp.eq.f32.partialorder %v83, 8.0
    %v176 = vld [vmem:[#allocation5 + $0x8] sm:$0x1]
    %v177 = vlaneseq
    %v178 = vshrl.u32 %v177, 7
    %v179 = vsub.s32 0, %v178
    %v180 = vrot.slane %v176, %v179
    %v181 = vsel %vm173, %v180, %v170
    %v182 = vsel %vm174, %v180, %v171
    %v183 = vsel %vm175, %v180, %v172
    %vm184 = vcmp.eq.f32.partialorder %v73, 9.0
    %vm185 = vcmp.eq.f32.partialorder %v78, 9.0
    %vm186 = vcmp.eq.f32.partialorder %v83, 9.0
    %v187 = vld [vmem:[#allocation5 + $0x9] sm:$0x1]
    %v188 = vlaneseq
    %v189 = vshrl.u32 %v188, 7
    %v190 = vsub.s32 0, %v189
    %v191 = vrot.slane %v187, %v190
    %v192 = vsel %vm184, %v191, %v181
    %v193 = vsel %vm185, %v191, %v182
    %v194 = vsel %vm186, %v191, %v183
    %vm195 = vcmp.eq.f32.partialorder %v73, 10.0
    %vm196 = vcmp.eq.f32.partialorder %v78, 10.0
    %vm197 = vcmp.eq.f32.partialorder %v83, 10.0
    %v198 = vld [vmem:[#allocation5 + $0xa] sm:$0x1]
    %v199 = vlaneseq
    %v200 = vshrl.u32 %v199, 7
    %v201 = vsub.s32 0, %v200
    %v202 = vrot.slane %v198, %v201
    %v203 = vsel %vm195, %v202, %v192
    %v204 = vsel %vm196, %v202, %v193
    %v205 = vsel %vm197, %v202, %v194
    %vm206 = vcmp.eq.f32.partialorder %v73, 11.0
    %vm207 = vcmp.eq.f32.partialorder %v78, 11.0
    %vm208 = vcmp.eq.f32.partialorder %v83, 11.0
    %v209 = vld [vmem:[#allocation5 + $0xb] sm:$0x1]
    %v210 = vlaneseq
    %v211 = vshrl.u32 %v210, 7
    %v212 = vsub.s32 0, %v211
    %v213 = vrot.slane %v209, %v212
    %v214 = vsel %vm206, %v213, %v203
    %v215 = vsel %vm207, %v213, %v204
    %v216 = vsel %vm208, %v213, %v205
    %vm217 = vcmp.eq.f32.partialorder %v73, 12.0
    %vm218 = vcmp.eq.f32.partialorder %v78, 12.0
    %vm219 = vcmp.eq.f32.partialorder %v83, 12.0
    %v220 = vld [vmem:[#allocation5 + $0xc] sm:$0x1]
    %v221 = vlaneseq
    %v222 = vshrl.u32 %v221, 7
    %v223 = vsub.s32 0, %v222
    %v224 = vrot.slane %v220, %v223
    %v225 = vsel %vm217, %v224, %v214
    %v226 = vsel %vm218, %v224, %v215
    %v227 = vsel %vm219, %v224, %v216
    %vm228 = vcmp.eq.f32.partialorder %v73, 13.0
    %vm229 = vcmp.eq.f32.partialorder %v78, 13.0
    %vm230 = vcmp.eq.f32.partialorder %v83, 13.0
    %v231 = vld [vmem:[#allocation5 + $0xd] sm:$0x1]
    %v232 = vlaneseq
    %v233 = vshrl.u32 %v232, 7
    %v234 = vsub.s32 0, %v233
    %v235 = vrot.slane %v231, %v234
    %v236 = vsel %vm228, %v235, %v225
    %v237 = vsel %vm229, %v235, %v226
    %v238 = vsel %vm230, %v235, %v227
    %vm239 = vcmp.eq.f32.partialorder %v73, 14.0
    %vm240 = vcmp.eq.f32.partialorder %v78, 14.0
    %vm241 = vcmp.eq.f32.partialorder %v83, 14.0
    %v242 = vld [vmem:[#allocation5 + $0xe] sm:$0x1]
    %v243 = vlaneseq
    %v244 = vshrl.u32 %v243, 7
    %v245 = vsub.s32 0, %v244
    %v246 = vrot.slane %v242, %v245
    %v247 = vsel %vm239, %v246, %v236
    %v248 = vsel %vm240, %v246, %v237
    %v249 = vsel %vm241, %v246, %v238
    %vm250 = vcmp.eq.f32.partialorder %v73, 15.0
    %vm251 = vcmp.eq.f32.partialorder %v78, 15.0
    %vm252 = vcmp.eq.f32.partialorder %v83, 15.0
    %v253 = vld [vmem:[#allocation5 + $0xf] sm:$0x1]
    %v254 = vlaneseq
    %v255 = vshrl.u32 %v254, 7
    %v256 = vsub.s32 0, %v255
    %v257 = vrot.slane %v253, %v256
    %v258 = vsel %vm250, %v257, %v247
    %v259 = vsel %vm251, %v257, %v248
    %v260 = vsel %vm252, %v257, %v249
    %v261 = vmul.f32 %v40, 2.0
    %v262 = vmul.f32 %v41, 2.0
    %v263 = vmul.f32 %v42, 2.0
    %v264 = vsub.f32 %v261, 1.0
    %v265 = vsub.f32 %v262, 1.0
    %v266 = vsub.f32 %v263, 1.0
    %v267 = vmul.f32 %v40, 0.5
    %v268 = vmul.f32 %v41, 0.5
    %v269 = vmul.f32 %v42, 0.5
    %273 = vrot.lane.b32.xlu0 %v267, 2
    %v274 = vpop.permute.xlu0 %273
    %275 = vrot.lane.b32.xlu0 %v268, 2
    %v276 = vpop.permute.xlu0 %275
    %277 = vrot.lane.b32.xlu0 %v269, 2
    %v278 = vpop.permute.xlu0 %277
    %v282 = vmul.f32 %v264, %v274
    %v283 = vmul.f32 %v265, %v276
    %v284 = vmul.f32 %v266, %v278
    %v285 = vmul.f32 %v282, 0.4
    %v286 = vmul.f32 %v283, 0.4
    %v287 = vmul.f32 %v284, 0.4
    %291 = vrot.lane.b32.xlu0 %v285, 124
    %v292 = vpop.permute.xlu0 %291
    %293 = vrot.lane.b32.xlu0 %v286, 124
    %v294 = vpop.permute.xlu0 %293
    %295 = vrot.lane.b32.xlu0 %v287, 124
    %v296 = vpop.permute.xlu0 %295
    %v300 = vadd.f32 %v40, %v292
    %v301 = vadd.f32 %v41, %v294
    %v302 = vadd.f32 %v42, %v296
    %v303 = vmax.f32 %v300, 0.0
    %v304 = vmax.f32 %v301, 0.0
    %v305 = vmax.f32 %v302, 0.0
    %v306 = vmin.f32 %v303, 1.0
    %v307 = vmin.f32 %v304, 1.0
    %v308 = vmin.f32 %v305, 1.0
    %309 = vrot.lane.b32.xlu0 %v40, 4
    %v310 = vpop.permute.xlu0 %309
    %311 = vrot.lane.b32.xlu0 %v41, 4
    %v312 = vpop.permute.xlu0 %311
    %313 = vrot.lane.b32.xlu0 %v42, 4
    %v314 = vpop.permute.xlu0 %313
    %v318 = vmul.f32 %v264, %v310
    %v319 = vmul.f32 %v265, %v312
    %v320 = vmul.f32 %v266, %v314
    %v321 = vmul.f32 %v318, 0.4
    %v322 = vmul.f32 %v319, 0.4
    %v323 = vmul.f32 %v320, 0.4
    %327 = vrot.lane.b32.xlu0 %v321, 124
    %v328 = vpop.permute.xlu0 %327
    %329 = vrot.lane.b32.xlu0 %v322, 124
    %v330 = vpop.permute.xlu0 %329
    %331 = vrot.lane.b32.xlu0 %v323, 124
    %v332 = vpop.permute.xlu0 %331
    %v336 = vadd.f32 %v40, %v328
    %v337 = vadd.f32 %v41, %v330
    %v338 = vadd.f32 %v42, %v332
    %v339 = vmax.f32 %v336, 0.0
    %v340 = vmax.f32 %v337, 0.0
    %v341 = vmax.f32 %v338, 0.0
    %v342 = vmin.f32 %v339, 1.0
    %v343 = vmin.f32 %v340, 1.0
    %v344 = vmin.f32 %v341, 1.0
    %345 = vset.pattern.permute.xlu0 3
    %346 = vperm.xlu0 %345, %v40
    %v347 = vpop.permute.xlu0 %346
    %349 = vset.pattern.permute.xlu0 3
    %350 = vperm.xlu0 %349, %v41
    %v351 = vpop.permute.xlu0 %350
    %353 = vset.pattern.permute.xlu0 3
    %354 = vperm.xlu0 %353, %v42
    %v355 = vpop.permute.xlu0 %354
    %v357 = vmul.f32 %v258, %v347
    %v358 = vmul.f32 %v259, %v351
    %v359 = vmul.f32 %v260, %v355
    %v360 = vmax.f32 %v306, 0.0
    %v361 = vmax.f32 %v307, 0.0
    %v362 = vmax.f32 %v308, 0.0
    %v363 = vmin.f32 %v360, 1.0
    %v364 = vmin.f32 %v361, 1.0
    %v365 = vmin.f32 %v362, 1.0
    %v366 = vmax.f32 %v363, 0.001
    %v367 = vmax.f32 %v364, 0.001
    %v368 = vmax.f32 %v365, 0.001
    %v369 = vsub.f32 1.0, %v363
    %v370 = vsub.f32 1.0, %v364
    %v371 = vsub.f32 1.0, %v365
    %v372 = vmax.f32 %v369, 0.001
    %v373 = vmax.f32 %v370, 0.001
    %v374 = vmax.f32 %v371, 0.001
    %v375 = vrcp.pop %v372
    %v376 = vmul.f32 %v366, %v375
    %v377 = vrcp.pop %v373
    %v378 = vmul.f32 %v367, %v377
    %v379 = vrcp.pop %v374
    %v380 = vmul.f32 %v368, %v379
    %v381 = vlog2.pop %v376
    %v382 = vmul.f32 %v381, 0.6931472
    %v383 = vlog2.pop %v378
    %v384 = vmul.f32 %v383, 0.6931472
    %v385 = vlog2.pop %v380
    %v386 = vmul.f32 %v385, 0.6931472
    %v387 = vmul.f32 %v382, %v347
    %v388 = vmul.f32 %v384, %v351
    %v389 = vmul.f32 %v386, %v355
    %v390 = vmax.f32 %v342, 0.0
    %v391 = vmax.f32 %v343, 0.0
    %v392 = vmax.f32 %v344, 0.0
    %v393 = vmin.f32 %v390, 1.0
    %v394 = vmin.f32 %v391, 1.0
    %v395 = vmin.f32 %v392, 1.0
    %v396 = vmax.f32 %v393, 0.001
    %v397 = vmax.f32 %v394, 0.001
    %v398 = vmax.f32 %v395, 0.001
    %v399 = vsub.f32 1.0, %v393
    %v400 = vsub.f32 1.0, %v394
    %v401 = vsub.f32 1.0, %v395
    %v402 = vmax.f32 %v399, 0.001
    %v403 = vmax.f32 %v400, 0.001
    %v404 = vmax.f32 %v401, 0.001
    %v405 = vrcp.pop %v402
    %v406 = vmul.f32 %v396, %v405
    %v407 = vrcp.pop %v403
    %v408 = vmul.f32 %v397, %v407
    %v409 = vrcp.pop %v404
    %v410 = vmul.f32 %v398, %v409
    %v411 = vlog2.pop %v406
    %v412 = vmul.f32 %v411, 0.6931472
    %v413 = vlog2.pop %v408
    %v414 = vmul.f32 %v413, 0.6931472
    %v415 = vlog2.pop %v410
    %v416 = vmul.f32 %v415, 0.6931472
    %v417 = vmul.f32 %v412, %v347
    %v418 = vmul.f32 %v414, %v351
    %v419 = vmul.f32 %v416, %v355
    %423 = vrot.lane.b32.xlu0 %v387, 28
    %v424 = vpop.permute.xlu0 %423
    %425 = vrot.lane.b32.xlu0 %v388, 28
    %v426 = vpop.permute.xlu0 %425
    %427 = vrot.lane.b32.xlu0 %v389, 28
    %v428 = vpop.permute.xlu0 %427
    %435 = vrot.lane.b32.xlu0 %v417, 28
    %v436 = vpop.permute.xlu0 %435
    %437 = vrot.lane.b32.xlu0 %v418, 28
    %v438 = vpop.permute.xlu0 %437
    %439 = vrot.lane.b32.xlu0 %v419, 28
    %v440 = vpop.permute.xlu0 %439
    %vm444 = vcmask 261120
    %v445 = vsel %vm444, %v357, %v424
    %v446 = vsel %vm444, %v358, %v426
    %v447 = vsel %vm444, %v359, %v428
    %vm448 = vcmask 277504
    %v449 = vsel %vm448, %v445, %v436
    %v450 = vsel %vm448, %v446, %v438
    %v451 = vsel %vm448, %v447, %v440
    %vm452 = vcmask 293888
    %v453 = vsel %vm452, %v449, 0.0
    %v454 = vsel %vm452, %v450, 0.0
    %v455 = vsel %vm452, %v451, 0.0
    %456 = vst [vmem:[#allocation7] sm:$0xff] %v453
    %457 = vst [vmem:[#allocation7 + $0x8] sm:$0xff] %v454
    %458 = vst [vmem:[#allocation7 + $0x10] sm:$0xff] %v455
    // Predicated region
    $region18: #{tpu_custom_call.1} parent=1 // pred_check
      _
    $region19: #{tpu_custom_call.1} parent=1 // pred_check_branch
      %460 = sbr.rel (0) target = $region21
    $region20: #{tpu_custom_call.1} parent=1 // pred_region
      %s462 = ssub.s32 384, 384
      %463 = vsyncadd [#allocation4], %s462
      %s464 = sshll.u32 [#allocation7], 4
      %s465 = int_to_ptr.vmem [resolvable:$true] %s464
      %470 = dma.vmem_to_hbm [thread:$0]  %s465, 384, %s2, [#allocation4], 128, 128, 8
    $region21: #{tpu_custom_call.1} parent=1 // pred_fallthru
      _
    // Predicated region
    $region22: #{tpu_custom_call.1} parent=1 // pred_check
      _
    $region23: #{tpu_custom_call.1} parent=1 // pred_check_branch
      %472 = sbr.rel (0) target = $region25
    $region24: #{tpu_custom_call.1} parent=1 // pred_region
      %473 = dma.done [#allocation4], 384
    $region25: #{tpu_custom_call.1} parent=1 // pred_fallthru
      _
    %474 = vsyncpa [#allocation3], 1
    %475 = vsyncpa [#allocation6], 1
    %476 = vsyncpa [#allocation4], 1

</llo_original>
